<compile_context>
chip_gen: v6e
topology: v6e:2x2x1
jax: 0.10.0
libtpu: 0.0.40
codegen_flags: <defaults>
</compile_context>

<pallas_src>
import numpy as np
import jax
import jax.numpy as jnp
from jax.experimental import pallas as pl
from jax.experimental.pallas import tpu as pltpu
from collections import namedtuple

# --------------------------------------------------------------------------
# Deterministic stand-in for `all_normalized_hpf_list` (SRM-style HPF bank).
# --------------------------------------------------------------------------
def _hpf_bank():
    f1_h = np.array([[0, 0, 0], [0, -1, 1], [0, 0, 0]], np.float32)
    f1_v = np.array([[0, 0, 0], [0, -1, 0], [0, 1, 0]], np.float32)
    f2_h = np.array([[0, 0, 0], [1, -2, 1], [0, 0, 0]], np.float32) / 2.0
    f2_v = np.array([[0, 1, 0], [0, -2, 0], [0, 1, 0]], np.float32) / 2.0
    f3 = np.array([[0, 0, 0, 0, 0],
                   [0, 0, 0, 0, 0],
                   [0, 1, -3, 3, -1],
                   [0, 0, 0, 0, 0],
                   [0, 0, 0, 0, 0]], np.float32) / 3.0
    sq3 = np.array([[-1, 2, -1],
                    [2, -4, 2],
                    [-1, 2, -1]], np.float32) / 4.0
    sq5 = np.array([[-1, 2, -2, 2, -1],
                    [2, -6, 8, -6, 2],
                    [-2, 8, -12, 8, -2],
                    [2, -6, 8, -6, 2],
                    [-1, 2, -2, 2, -1]], np.float32) / 12.0
    e3 = np.array([[-1, 2, -1],
                   [2, -4, 2],
                   [0, 0, 0]], np.float32) / 4.0
    e5 = np.array([[-1, 2, -2, 2, -1],
                   [2, -6, 8, -6, 2],
                   [-2, 8, -12, 8, -2],
                   [0, 0, 0, 0, 0],
                   [0, 0, 0, 0, 0]], np.float32) / 12.0
    return [f1_h, f1_v, f2_h, f2_v, f3, sq3, sq5, e3, e5]


all_normalized_hpf_list = _hpf_bank()


def build_filters():
    filters = []
    for hpf_item in all_normalized_hpf_list:
        row_1 = int((5 - hpf_item.shape[0]) / 2)
        row_2 = int(5 - hpf_item.shape[0] - row_1)
        col_1 = int((5 - hpf_item.shape[1]) / 2)
        col_2 = int(5 - hpf_item.shape[1] - col_1)
        hpf_item = np.pad(hpf_item, pad_width=((row_1, row_2), (col_1, col_2)),
                          mode='constant')
        filters.append(hpf_item)
    return filters


Genotype = namedtuple("Genotype", ["hpf_select"])

# --------------------------------------------------------------------------
# Pallas kernel
# --------------------------------------------------------------------------
KSIZE = 5
PAD = 2
NOUT = 16
THRESH = 5.0
GROUP_SIZE = 8          # unique-filter accumulators live at once (<=16 vregs)


def _round_up(x, m):
    return ((x + m - 1) // m) * m


def _pick_row_tile(H):
    """Output rows per grid step.

    Multiple-of-8 divisor of H, <=16 (keeps each per-filter accumulator at
    <=2 vregs with TW<=256) and giving >=2 row tiles whenever possible so the
    grid has truly independent parallel steps (v7x dual TC / megacore)."""
    if H <= 8 or H % 8 != 0:
        return H
    cands = [th for th in range(8, H, 8) if H % th == 0]   # excludes H -> >=2 tiles
    if not cands:
        return H
    small = [th for th in cands if th <= 16]
    return max(small) if small else min(cands)


def _pick_lane_tile(Wout, TH):
    """Lane tile: multiple of 128 dividing Wout, with TH*TW <= 2048 f32 elems
    so each accumulator is <=2 vregs (no register spills)."""
    max_m = max(1, 2048 // (TH * 128))
    nlanes = Wout // 128
    best = 1
    for m in range(1, min(max_m, nlanes) + 1):
        if nlanes % m == 0:
            best = m
    return best * 128


def _build_unique_taps(weight):
    """weight (16,1,5,5) -> deduped per-unique-filter taps with common scale
    factored out.

    Returns:
      unique_taps : list of (scale, [(di, dj, coeff), ...]) with coeff = w/scale
      u_to_chans  : list (per unique filter) of output-channel indices using it
    """
    w = np.asarray(weight, np.float32).reshape(NOUT, KSIZE, KSIZE)
    uniques = []
    chan_to_u = []
    for c in range(NOUT):
        key = w[c].tobytes()
        found = None
        for u, wu in enumerate(uniques):
            if wu.tobytes() == key:
                found = u
                break
        if found is None:
            uniques.append(w[c])
            found = len(uniques) - 1
        chan_to_u.append(found)

    unique_taps = []
    for wu in uniques:
        taps = [(di, dj, float(wu[di, dj]))
                for di in range(KSIZE) for dj in range(KSIZE)
                if float(wu[di, dj]) != 0.0]
        if taps:
            scale = min(abs(v) for (_, _, v) in taps)
            coeffs = [(di, dj, v / scale) for (di, dj, v) in taps]
        else:
            scale, coeffs = 1.0, []
        unique_taps.append((float(scale), coeffs))

    u_to_chans = [[c for c in range(NOUT) if chan_to_u[c] == u]
                  for u in range(len(uniques))]
    return unique_taps, u_to_chans


def _make_kernel(unique_taps, u_to_chans, *, TH, TW, group_size):
    """Generate the kernel with the (constant) HPF taps baked in.

    Structure: tap-outer / channel-inner.  For each group of <= group_size
    unique filters, loop over the union of (di,dj) offsets, build the shifted
    (TH, TW) window once, and MAC it into each live accumulator."""
    n_unique = len(unique_taps)
    groups = [list(range(g, min(g + group_size, n_unique)))
              for g in range(0, n_unique, group_size)]

    def kernel(cv_ref, o_ref):
        # Small (TH+4, TW+4) tile, loaded once per grid step.
        cw = cv_ref[...].astype(jnp.float32)

        for grp in groups:
            tap_map = {u: {(di, dj): cf for (di, dj, cf) in unique_taps[u][1]}
                       for u in grp}
            offsets = sorted({od for u in grp for od in tap_map[u]})
            accs = {u: None for u in grp}

            for (di, dj) in offsets:
                # Window built exactly once per offset (per group), shared by
                # every filter in the group.  Static slice -> cheap shift.
                win = cw[di:di + TH, dj:dj + TW]
                for u in grp:
                    cf = tap_map[u].get((di, dj))
                    if cf is None:                       # zero tap: skipped
                        continue
                    a = accs[u]
                    if abs(cf - 1.0) < 1e-6:             # +1 tap: pure add
                        accs[u] = win if a is None else a + win
                    elif abs(cf + 1.0) < 1e-6:           # -1 tap: pure sub
                        accs[u] = -win if a is None else a - win
                    else:
                        accs[u] = cf * win if a is None else a + cf * win

            for u in grp:
                scale = unique_taps[u][0]
                acc = accs[u]
                if acc is None:
                    acc = jnp.zeros((TH, TW), jnp.float32)
                if scale != 1.0:                         # one mul per channel
                    acc = acc * scale
                val = jnp.clip(acc, -THRESH, THRESH).astype(o_ref.dtype)
                # Duplicate channels reuse the same accumulator (dedup): only
                # the clamp/store is repeated, never the MAC work.
                for c in u_to_chans[u]:
                    o_ref[c, :, :] = val

    return kernel


def mixed_hpf(x, weight):
    """x: (B, 1, H, W) float NCHW.  weight: (16, 1, 5, 5).  -> (B, 16, H, W)."""
    B, C, H, W = x.shape
    assert C == 1

    Wimg = W + 2 * PAD                       # per-image padded width
    Wout = _round_up(B * Wimg, 128)          # lane width of compute/output (dense)
    TH = _pick_row_tile(H)
    TW = _pick_lane_tile(Wout, TH)
    nh, nw = H // TH, Wout // TW

    # Batch-packed, zero-padded canvas: canvas[r, b*Wimg + k] = xpad[b, r, k].
    xp = jnp.pad(x[:, 0], ((0, 0), (PAD, PAD), (PAD, PAD)))        # (B, H+4, Wimg)
    canvas = jnp.transpose(xp, (1, 0, 2)).reshape(H + 2 * PAD, B * Wimg)
    canvas = jnp.pad(canvas, ((0, 0), (0, Wout + 2 * PAD - B * Wimg)))  # (H+4, Wout+4)

    # Pre-materialize row/lane halos so BlockSpec blocks are non-overlapping:
    # canvas4[r, t] = canvas[r*TH : r*TH+TH+4, t*TW : t*TW+TW+4].
    rows = jnp.stack([canvas[r * TH: r * TH + TH + 2 * PAD] for r in range(nh)], 0)
    canvas4 = jnp.stack([rows[:, :, t * TW: t * TW + TW + 2 * PAD]
                         for t in range(nw)], 1)                    # (nh, nw, TH+4, TW+4)

    unique_taps, u_to_chans = _build_unique_taps(weight)
    kernel = _make_kernel(unique_taps, u_to_chans, TH=TH, TW=TW,
                          group_size=GROUP_SIZE)

    # Tiny, B*W-independent VMEM footprint; cap well under v7x's 64 MiB/TC.
    in_blk = _round_up(TH + 2 * PAD, 8) * _round_up(TW + 2 * PAD, 128) * 4
    out_blk = NOUT * TH * TW * 4
    vmem_limit = int(min(40 * 2**20, max(4 * 2**20, 8 * (in_blk + out_blk))))

    out_full = pl.pallas_call(
        kernel,
        out_shape=jax.ShapeDtypeStruct((NOUT, H, Wout), x.dtype),
        grid_spec=pltpu.PrefetchScalarGridSpec(
            num_scalar_prefetch=0,
            grid=(nh, nw),
            in_specs=[
                pl.BlockSpec((None, None, TH + 2 * PAD, TW + 2 * PAD),
                             lambda r, t: (r, t, 0, 0)),
            ],
            out_specs=pl.BlockSpec((NOUT, TH, TW), lambda r, t: (0, r, t)),
        ),
        compiler_params=pltpu.CompilerParams(
            dimension_semantics=("parallel", "parallel"),
            vmem_limit_bytes=vmem_limit),
    )(canvas4)

    # Unpack: out_full[c, i, b*Wimg + j] == conv(x)[b, c, i, j] for j < W.
    # (Cross-image lane bleed lives only in j in [W, Wimg) and is cropped here.)
    out = out_full[:, :, :B * Wimg].reshape(NOUT, H, B, Wimg)[:, :, :, :W]
    return jnp.transpose(out, (2, 0, 1, 3))                        # (B, NOUT, H, W)


# --------------------------------------------------------------------------
# Parameter construction (mirrors MixedHpf.__init__)
# --------------------------------------------------------------------------
def make_hpf_weight(genotype):
    filt_list = build_filters()                        # list of (5, 5)
    hpf_weight = np.stack(filt_list, axis=0)           # (n_filters, 5, 5)
    selected = [hpf_weight[i] for i in genotype.hpf_select]
    w = np.concatenate(selected, axis=0)               # (16*5, 5)
    return jnp.asarray(w.reshape(NOUT, 1, KSIZE, KSIZE), jnp.float32)


if __name__ == "__main__":
    # Deterministic genotype selecting 16 filters from the bank (with repeats
    # -> exercises the channel-dedup path).
    genotype = Genotype(hpf_select=[i % len(all_normalized_hpf_list) for i in range(16)])
    weight = make_hpf_weight(genotype)                  # (16, 1, 5, 5)

    key = jax.random.PRNGKey(0)
    x = jax.random.normal(key, (2, 1, 16, 16), dtype=jnp.float32) * 4.0  # NCHW

    out = mixed_hpf(x, weight)
    out = jax.block_until_ready(out)

    # Reference: XLA conv + clamp (same semantics as torch Conv2d(pad=2) + TLU(5)).
    ref = jax.lax.conv_general_dilated(
        x, weight, window_strides=(1, 1), padding=((PAD, PAD), (PAD, PAD)),
        dimension_numbers=("NCHW", "OIHW", "NCHW"))
    ref = jnp.clip(ref, -THRESH, THRESH)

    assert out.shape == (2, 16, 16, 16)
    np.testing.assert_allclose(np.asarray(out), np.asarray(ref), rtol=1e-5, atol=1e-5)
    print("KERNEL_OK")
</pallas_src>

<mosaic_0001>
module attributes {stable_mosaic.version = 11 : i64} {
  func.func @kernel(%arg0: i32, %arg1: i32, %arg2: memref<1x1x12x132xf32, #tpu.memory_space<vmem>>, %arg3: memref<16x8x128xf32, #tpu.memory_space<vmem>>) attributes {dimension_semantics = [#tpu.dimension_semantics<parallel>, #tpu.dimension_semantics<parallel>], iteration_bounds = array<i64: 2, 1>, scalar_prefetch = 0 : i64, scratch_operands = 0 : i64, tpu.core_type = #tpu.core_type<tc>, window_params = [{transform_indices = @transform_0, window_bounds = array<i64: 1, 1, 12, 132>}, {transform_indices = @transform_1, window_bounds = array<i64: 16, 8, 128>}]} {
    %c0 = arith.constant 0 : index
    %c0_0 = arith.constant 0 : index
    %c0_1 = arith.constant 0 : index
    %c0_2 = arith.constant 0 : index
    %0 = vector.load %arg2[%c0, %c0_0, %c0_1, %c0_2] : memref<1x1x12x132xf32, #tpu.memory_space<vmem>>, vector<1x1x12x132xf32>
    %1 = vector.shape_cast %0 : vector<1x1x12x132xf32> to vector<12x132xf32>
    %2 = vector.extract_strided_slice %1 {offsets = [0, 0], sizes = [8, 128], strides = [1, 1]} : vector<12x132xf32> to vector<8x128xf32>
    %cst = arith.constant 0.000000e+00 : f32
    %3 = vector.broadcast %cst : f32 to vector<8x128xf32>
    %4 = arith.subf %3, %2 : vector<8x128xf32>
    %5 = vector.extract_strided_slice %1 {offsets = [0, 1], sizes = [8, 128], strides = [1, 1]} : vector<12x132xf32> to vector<8x128xf32>
    %cst_3 = arith.constant 2.000000e+00 : f32
    %6 = vector.broadcast %cst_3 : f32 to vector<8x128xf32>
    %7 = arith.mulf %6, %5 : vector<8x128xf32>
    %8 = arith.addf %4, %7 : vector<8x128xf32>
    %9 = vector.extract_strided_slice %1 {offsets = [0, 2], sizes = [8, 128], strides = [1, 1]} : vector<12x132xf32> to vector<8x128xf32>
    %cst_4 = arith.constant -2.000000e+00 : f32
    %10 = vector.broadcast %cst_4 : f32 to vector<8x128xf32>
    %11 = arith.mulf %10, %9 : vector<8x128xf32>
    %12 = arith.addf %8, %11 : vector<8x128xf32>
    %13 = vector.extract_strided_slice %1 {offsets = [0, 3], sizes = [8, 128], strides = [1, 1]} : vector<12x132xf32> to vector<8x128xf32>
    %cst_5 = arith.constant 2.000000e+00 : f32
    %14 = vector.broadcast %cst_5 : f32 to vector<8x128xf32>
    %15 = arith.mulf %14, %13 : vector<8x128xf32>
    %16 = arith.addf %12, %15 : vector<8x128xf32>
    %17 = vector.extract_strided_slice %1 {offsets = [0, 4], sizes = [8, 128], strides = [1, 1]} : vector<12x132xf32> to vector<8x128xf32>
    %18 = arith.subf %16, %17 : vector<8x128xf32>
    %19 = vector.extract_strided_slice %1 {offsets = [1, 0], sizes = [8, 128], strides = [1, 1]} : vector<12x132xf32> to vector<8x128xf32>
    %cst_6 = arith.constant 2.000000e+00 : f32
    %20 = vector.broadcast %cst_6 : f32 to vector<8x128xf32>
    %21 = arith.mulf %20, %19 : vector<8x128xf32>
    %22 = arith.addf %18, %21 : vector<8x128xf32>
    %23 = vector.extract_strided_slice %1 {offsets = [1, 1], sizes = [8, 128], strides = [1, 1]} : vector<12x132xf32> to vector<8x128xf32>
    %cst_7 = arith.constant 0.000000e+00 : f32
    %24 = vector.broadcast %cst_7 : f32 to vector<8x128xf32>
    %25 = arith.subf %24, %23 : vector<8x128xf32>
    %cst_8 = arith.constant -6.000000e+00 : f32
    %26 = vector.broadcast %cst_8 : f32 to vector<8x128xf32>
    %27 = arith.mulf %26, %23 : vector<8x128xf32>
    %28 = arith.addf %22, %27 : vector<8x128xf32>
    %cst_9 = arith.constant 0.000000e+00 : f32
    %29 = vector.broadcast %cst_9 : f32 to vector<8x128xf32>
    %30 = arith.subf %29, %23 : vector<8x128xf32>
    %31 = vector.extract_strided_slice %1 {offsets = [1, 2], sizes = [8, 128], strides = [1, 1]} : vector<12x132xf32> to vector<8x128xf32>
    %cst_10 = arith.constant 2.000000e+00 : f32
    %32 = vector.broadcast %cst_10 : f32 to vector<8x128xf32>
    %33 = arith.mulf %32, %31 : vector<8x128xf32>
    %34 = arith.addf %25, %33 : vector<8x128xf32>
    %cst_11 = arith.constant 8.000000e+00 : f32
    %35 = vector.broadcast %cst_11 : f32 to vector<8x128xf32>
    %36 = arith.mulf %35, %31 : vector<8x128xf32>
    %37 = arith.addf %28, %36 : vector<8x128xf32>
    %cst_12 = arith.constant 2.000000e+00 : f32
    %38 = vector.broadcast %cst_12 : f32 to vector<8x128xf32>
    %39 = arith.mulf %38, %31 : vector<8x128xf32>
    %40 = arith.addf %30, %39 : vector<8x128xf32>
    %41 = vector.extract_strided_slice %1 {offsets = [1, 3], sizes = [8, 128], strides = [1, 1]} : vector<12x132xf32> to vector<8x128xf32>
    %42 = arith.subf %34, %41 : vector<8x128xf32>
    %cst_13 = arith.constant -6.000000e+00 : f32
    %43 = vector.broadcast %cst_13 : f32 to vector<8x128xf32>
    %44 = arith.mulf %43, %41 : vector<8x128xf32>
    %45 = arith.addf %37, %44 : vector<8x128xf32>
    %46 = arith.subf %40, %41 : vector<8x128xf32>
    %47 = vector.extract_strided_slice %1 {offsets = [1, 4], sizes = [8, 128], strides = [1, 1]} : vector<12x132xf32> to vector<8x128xf32>
    %cst_14 = arith.constant 2.000000e+00 : f32
    %48 = vector.broadcast %cst_14 : f32 to vector<8x128xf32>
    %49 = arith.mulf %48, %47 : vector<8x128xf32>
    %50 = arith.addf %45, %49 : vector<8x128xf32>
    %51 = vector.extract_strided_slice %1 {offsets = [2, 0], sizes = [8, 128], strides = [1, 1]} : vector<12x132xf32> to vector<8x128xf32>
    %cst_15 = arith.constant -2.000000e+00 : f32
    %52 = vector.broadcast %cst_15 : f32 to vector<8x128xf32>
    %53 = arith.mulf %52, %51 : vector<8x128xf32>
    %54 = arith.addf %50, %53 : vector<8x128xf32>
    %55 = vector.extract_strided_slice %1 {offsets = [2, 1], sizes = [8, 128], strides = [1, 1]} : vector<12x132xf32> to vector<8x128xf32>
    %cst_16 = arith.constant 2.000000e+00 : f32
    %56 = vector.broadcast %cst_16 : f32 to vector<8x128xf32>
    %57 = arith.mulf %56, %55 : vector<8x128xf32>
    %58 = arith.addf %42, %57 : vector<8x128xf32>
    %cst_17 = arith.constant 8.000000e+00 : f32
    %59 = vector.broadcast %cst_17 : f32 to vector<8x128xf32>
    %60 = arith.mulf %59, %55 : vector<8x128xf32>
    %61 = arith.addf %54, %60 : vector<8x128xf32>
    %cst_18 = arith.constant 2.000000e+00 : f32
    %62 = vector.broadcast %cst_18 : f32 to vector<8x128xf32>
    %63 = arith.mulf %62, %55 : vector<8x128xf32>
    %64 = arith.addf %46, %63 : vector<8x128xf32>
    %65 = vector.extract_strided_slice %1 {offsets = [2, 2], sizes = [8, 128], strides = [1, 1]} : vector<12x132xf32> to vector<8x128xf32>
    %cst_19 = arith.constant 0.000000e+00 : f32
    %66 = vector.broadcast %cst_19 : f32 to vector<8x128xf32>
    %67 = arith.subf %66, %65 : vector<8x128xf32>
    %cst_20 = arith.constant 0.000000e+00 : f32
    %68 = vector.broadcast %cst_20 : f32 to vector<8x128xf32>
    %69 = arith.subf %68, %65 : vector<8x128xf32>
    %cst_21 = arith.constant -2.000000e+00 : f32
    %70 = vector.broadcast %cst_21 : f32 to vector<8x128xf32>
    %71 = arith.mulf %70, %65 : vector<8x128xf32>
    %72 = arith.addf %55, %71 : vector<8x128xf32>
    %cst_22 = arith.constant -2.000000e+00 : f32
    %73 = vector.broadcast %cst_22 : f32 to vector<8x128xf32>
    %74 = arith.mulf %73, %65 : vector<8x128xf32>
    %75 = arith.addf %31, %74 : vector<8x128xf32>
    %cst_23 = arith.constant -3.000000e+00 : f32
    %76 = vector.broadcast %cst_23 : f32 to vector<8x128xf32>
    %77 = arith.mulf %76, %65 : vector<8x128xf32>
    %78 = arith.addf %55, %77 : vector<8x128xf32>
    %cst_24 = arith.constant -4.000000e+00 : f32
    %79 = vector.broadcast %cst_24 : f32 to vector<8x128xf32>
    %80 = arith.mulf %79, %65 : vector<8x128xf32>
    %81 = arith.addf %58, %80 : vector<8x128xf32>
    %cst_25 = arith.constant -1.200000e+01 : f32
    %82 = vector.broadcast %cst_25 : f32 to vector<8x128xf32>
    %83 = arith.mulf %82, %65 : vector<8x128xf32>
    %84 = arith.addf %61, %83 : vector<8x128xf32>
    %cst_26 = arith.constant -4.000000e+00 : f32
    %85 = vector.broadcast %cst_26 : f32 to vector<8x128xf32>
    %86 = arith.mulf %85, %65 : vector<8x128xf32>
    %87 = arith.addf %64, %86 : vector<8x128xf32>
    %88 = vector.extract_strided_slice %1 {offsets = [2, 3], sizes = [8, 128], strides = [1, 1]} : vector<12x132xf32> to vector<8x128xf32>
    %89 = arith.addf %67, %88 : vector<8x128xf32>
    %90 = arith.addf %72, %88 : vector<8x128xf32>
    %cst_27 = arith.constant 3.000000e+00 : f32
    %91 = vector.broadcast %cst_27 : f32 to vector<8x128xf32>
    %92 = arith.mulf %91, %88 : vector<8x128xf32>
    %93 = arith.addf %78, %92 : vector<8x128xf32>
    %cst_28 = arith.constant 2.000000e+00 : f32
    %94 = vector.broadcast %cst_28 : f32 to vector<8x128xf32>
    %95 = arith.mulf %94, %88 : vector<8x128xf32>
    %96 = arith.addf %81, %95 : vector<8x128xf32>
    %cst_29 = arith.constant 8.000000e+00 : f32
    %97 = vector.broadcast %cst_29 : f32 to vector<8x128xf32>
    %98 = arith.mulf %97, %88 : vector<8x128xf32>
    %99 = arith.addf %84, %98 : vector<8x128xf32>
    %cst_30 = arith.constant 2.000000e+00 : f32
    %100 = vector.broadcast %cst_30 : f32 to vector<8x128xf32>
    %101 = arith.mulf %100, %88 : vector<8x128xf32>
    %102 = arith.addf %87, %101 : vector<8x128xf32>
    %103 = vector.extract_strided_slice %1 {offsets = [2, 4], sizes = [8, 128], strides = [1, 1]} : vector<12x132xf32> to vector<8x128xf32>
    %104 = arith.subf %93, %103 : vector<8x128xf32>
    %cst_31 = arith.constant -2.000000e+00 : f32
    %105 = vector.broadcast %cst_31 : f32 to vector<8x128xf32>
    %106 = arith.mulf %105, %103 : vector<8x128xf32>
    %107 = arith.addf %99, %106 : vector<8x128xf32>
    %108 = vector.extract_strided_slice %1 {offsets = [3, 0], sizes = [8, 128], strides = [1, 1]} : vector<12x132xf32> to vector<8x128xf32>
    %cst_32 = arith.constant 2.000000e+00 : f32
    %109 = vector.broadcast %cst_32 : f32 to vector<8x128xf32>
    %110 = arith.mulf %109, %108 : vector<8x128xf32>
    %111 = arith.addf %107, %110 : vector<8x128xf32>
    %112 = vector.extract_strided_slice %1 {offsets = [3, 1], sizes = [8, 128], strides = [1, 1]} : vector<12x132xf32> to vector<8x128xf32>
    %113 = arith.subf %96, %112 : vector<8x128xf32>
    %cst_33 = arith.constant -6.000000e+00 : f32
    %114 = vector.broadcast %cst_33 : f32 to vector<8x128xf32>
    %115 = arith.mulf %114, %112 : vector<8x128xf32>
    %116 = arith.addf %111, %115 : vector<8x128xf32>
    %117 = vector.extract_strided_slice %1 {offsets = [3, 2], sizes = [8, 128], strides = [1, 1]} : vector<12x132xf32> to vector<8x128xf32>
    %118 = arith.addf %69, %117 : vector<8x128xf32>
    %119 = arith.addf %75, %117 : vector<8x128xf32>
    %cst_34 = arith.constant 2.000000e+00 : f32
    %120 = vector.broadcast %cst_34 : f32 to vector<8x128xf32>
    %121 = arith.mulf %120, %117 : vector<8x128xf32>
    %122 = arith.addf %113, %121 : vector<8x128xf32>
    %cst_35 = arith.constant 8.000000e+00 : f32
    %123 = vector.broadcast %cst_35 : f32 to vector<8x128xf32>
    %124 = arith.mulf %123, %117 : vector<8x128xf32>
    %125 = arith.addf %116, %124 : vector<8x128xf32>
    %126 = vector.extract_strided_slice %1 {offsets = [3, 3], sizes = [8, 128], strides = [1, 1]} : vector<12x132xf32> to vector<8x128xf32>
    %127 = arith.subf %122, %126 : vector<8x128xf32>
    %cst_36 = arith.constant -6.000000e+00 : f32
    %128 = vector.broadcast %cst_36 : f32 to vector<8x128xf32>
    %129 = arith.mulf %128, %126 : vector<8x128xf32>
    %130 = arith.addf %125, %129 : vector<8x128xf32>
    %131 = vector.extract_strided_slice %1 {offsets = [3, 4], sizes = [8, 128], strides = [1, 1]} : vector<12x132xf32> to vector<8x128xf32>
    %cst_37 = arith.constant 2.000000e+00 : f32
    %132 = vector.broadcast %cst_37 : f32 to vector<8x128xf32>
    %133 = arith.mulf %132, %131 : vector<8x128xf32>
    %134 = arith.addf %130, %133 : vector<8x128xf32>
    %135 = vector.extract_strided_slice %1 {offsets = [4, 0], sizes = [8, 128], strides = [1, 1]} : vector<12x132xf32> to vector<8x128xf32>
    %136 = arith.subf %134, %135 : vector<8x128xf32>
    %137 = vector.extract_strided_slice %1 {offsets = [4, 1], sizes = [8, 128], strides = [1, 1]} : vector<12x132xf32> to vector<8x128xf32>
    %cst_38 = arith.constant 2.000000e+00 : f32
    %138 = vector.broadcast %cst_38 : f32 to vector<8x128xf32>
    %139 = arith.mulf %138, %137 : vector<8x128xf32>
    %140 = arith.addf %136, %139 : vector<8x128xf32>
    %141 = vector.extract_strided_slice %1 {offsets = [4, 2], sizes = [8, 128], strides = [1, 1]} : vector<12x132xf32> to vector<8x128xf32>
    %cst_39 = arith.constant -2.000000e+00 : f32
    %142 = vector.broadcast %cst_39 : f32 to vector<8x128xf32>
    %143 = arith.mulf %142, %141 : vector<8x128xf32>
    %144 = arith.addf %140, %143 : vector<8x128xf32>
    %145 = vector.extract_strided_slice %1 {offsets = [4, 3], sizes = [8, 128], strides = [1, 1]} : vector<12x132xf32> to vector<8x128xf32>
    %cst_40 = arith.constant 2.000000e+00 : f32
    %146 = vector.broadcast %cst_40 : f32 to vector<8x128xf32>
    %147 = arith.mulf %146, %145 : vector<8x128xf32>
    %148 = arith.addf %144, %147 : vector<8x128xf32>
    %149 = vector.extract_strided_slice %1 {offsets = [4, 4], sizes = [8, 128], strides = [1, 1]} : vector<12x132xf32> to vector<8x128xf32>
    %150 = arith.subf %148, %149 : vector<8x128xf32>
    %cst_41 = arith.constant -5.000000e+00 : f32
    %cst_42 = arith.constant 5.000000e+00 : f32
    %151 = vector.broadcast %cst_41 : f32 to vector<8x128xf32>
    %152 = arith.maximumf %151, %89 : vector<8x128xf32>
    %153 = vector.broadcast %cst_42 : f32 to vector<8x128xf32>
    %154 = arith.minimumf %153, %152 : vector<8x128xf32>
    %c0_43 = arith.constant 0 : index
    %c0_44 = arith.constant 0 : index
    %c0_45 = arith.constant 0 : index
    %155 = vector.load %arg3[%c0_43, %c0_44, %c0_45] : memref<16x8x128xf32, #tpu.memory_space<vmem>>, vector<1x8x128xf32>
    %156 = vector.shape_cast %155 : vector<1x8x128xf32> to vector<8x128xf32>
    %157 = vector.shape_cast %154 : vector<8x128xf32> to vector<1x8x128xf32>
    tpu.vector_store %arg3[%c0_43, %c0_44, %c0_45], %157 {strides = array<i32>} : memref<16x8x128xf32, #tpu.memory_space<vmem>>, vector<1x8x128xf32>,
    %c9 = arith.constant 9 : index
    %c0_46 = arith.constant 0 : index
    %c0_47 = arith.constant 0 : index
    %158 = vector.load %arg3[%c9, %c0_46, %c0_47] : memref<16x8x128xf32, #tpu.memory_space<vmem>>, vector<1x8x128xf32>
    %159 = vector.shape_cast %158 : vector<1x8x128xf32> to vector<8x128xf32>
    %160 = vector.shape_cast %154 : vector<8x128xf32> to vector<1x8x128xf32>
    tpu.vector_store %arg3[%c9, %c0_46, %c0_47], %160 {strides = array<i32>} : memref<16x8x128xf32, #tpu.memory_space<vmem>>, vector<1x8x128xf32>,
    %cst_48 = arith.constant -5.000000e+00 : f32
    %cst_49 = arith.constant 5.000000e+00 : f32
    %161 = vector.broadcast %cst_48 : f32 to vector<8x128xf32>
    %162 = arith.maximumf %161, %118 : vector<8x128xf32>
    %163 = vector.broadcast %cst_49 : f32 to vector<8x128xf32>
    %164 = arith.minimumf %163, %162 : vector<8x128xf32>
    %c1 = arith.constant 1 : index
    %c0_50 = arith.constant 0 : index
    %c0_51 = arith.constant 0 : index
    %165 = vector.load %arg3[%c1, %c0_50, %c0_51] : memref<16x8x128xf32, #tpu.memory_space<vmem>>, vector<1x8x128xf32>
    %166 = vector.shape_cast %165 : vector<1x8x128xf32> to vector<8x128xf32>
    %167 = vector.shape_cast %164 : vector<8x128xf32> to vector<1x8x128xf32>
    tpu.vector_store %arg3[%c1, %c0_50, %c0_51], %167 {strides = array<i32>} : memref<16x8x128xf32, #tpu.memory_space<vmem>>, vector<1x8x128xf32>,
    %c10 = arith.constant 10 : index
    %c0_52 = arith.constant 0 : index
    %c0_53 = arith.constant 0 : index
    %168 = vector.load %arg3[%c10, %c0_52, %c0_53] : memref<16x8x128xf32, #tpu.memory_space<vmem>>, vector<1x8x128xf32>
    %169 = vector.shape_cast %168 : vector<1x8x128xf32> to vector<8x128xf32>
    %170 = vector.shape_cast %164 : vector<8x128xf32> to vector<1x8x128xf32>
    tpu.vector_store %arg3[%c10, %c0_52, %c0_53], %170 {strides = array<i32>} : memref<16x8x128xf32, #tpu.memory_space<vmem>>, vector<1x8x128xf32>,
    %cst_54 = arith.constant 5.000000e-01 : f32
    %171 = vector.broadcast %cst_54 : f32 to vector<8x128xf32>
    %172 = arith.mulf %90, %171 : vector<8x128xf32>
    %cst_55 = arith.constant -5.000000e+00 : f32
    %cst_56 = arith.constant 5.000000e+00 : f32
    %173 = vector.broadcast %cst_55 : f32 to vector<8x128xf32>
    %174 = arith.maximumf %173, %172 : vector<8x128xf32>
    %175 = vector.broadcast %cst_56 : f32 to vector<8x128xf32>
    %176 = arith.minimumf %175, %174 : vector<8x128xf32>
    %c2 = arith.constant 2 : index
    %c0_57 = arith.constant 0 : index
    %c0_58 = arith.constant 0 : index
    %177 = vector.load %arg3[%c2, %c0_57, %c0_58] : memref<16x8x128xf32, #tpu.memory_space<vmem>>, vector<1x8x128xf32>
    %178 = vector.shape_cast %177 : vector<1x8x128xf32> to vector<8x128xf32>
    %179 = vector.shape_cast %176 : vector<8x128xf32> to vector<1x8x128xf32>
    tpu.vector_store %arg3[%c2, %c0_57, %c0_58], %179 {strides = array<i32>} : memref<16x8x128xf32, #tpu.memory_space<vmem>>, vector<1x8x128xf32>,
    %c11 = arith.constant 11 : index
    %c0_59 = arith.constant 0 : index
    %c0_60 = arith.constant 0 : index
    %180 = vector.load %arg3[%c11, %c0_59, %c0_60] : memref<16x8x128xf32, #tpu.memory_space<vmem>>, vector<1x8x128xf32>
    %181 = vector.shape_cast %180 : vector<1x8x128xf32> to vector<8x128xf32>
    %182 = vector.shape_cast %176 : vector<8x128xf32> to vector<1x8x128xf32>
    tpu.vector_store %arg3[%c11, %c0_59, %c0_60], %182 {strides = array<i32>} : memref<16x8x128xf32, #tpu.memory_space<vmem>>, vector<1x8x128xf32>,
    %cst_61 = arith.constant 5.000000e-01 : f32
    %183 = vector.broadcast %cst_61 : f32 to vector<8x128xf32>
    %184 = arith.mulf %119, %183 : vector<8x128xf32>
    %cst_62 = arith.constant -5.000000e+00 : f32
    %cst_63 = arith.constant 5.000000e+00 : f32
    %185 = vector.broadcast %cst_62 : f32 to vector<8x128xf32>
    %186 = arith.maximumf %185, %184 : vector<8x128xf32>
    %187 = vector.broadcast %cst_63 : f32 to vector<8x128xf32>
    %188 = arith.minimumf %187, %186 : vector<8x128xf32>
    %c3 = arith.constant 3 : index
    %c0_64 = arith.constant 0 : index
    %c0_65 = arith.constant 0 : index
    %189 = vector.load %arg3[%c3, %c0_64, %c0_65] : memref<16x8x128xf32, #tpu.memory_space<vmem>>, vector<1x8x128xf32>
    %190 = vector.shape_cast %189 : vector<1x8x128xf32> to vector<8x128xf32>
    %191 = vector.shape_cast %188 : vector<8x128xf32> to vector<1x8x128xf32>
    tpu.vector_store %arg3[%c3, %c0_64, %c0_65], %191 {strides = array<i32>} : memref<16x8x128xf32, #tpu.memory_space<vmem>>, vector<1x8x128xf32>,
    %c12 = arith.constant 12 : index
    %c0_66 = arith.constant 0 : index
    %c0_67 = arith.constant 0 : index
    %192 = vector.load %arg3[%c12, %c0_66, %c0_67] : memref<16x8x128xf32, #tpu.memory_space<vmem>>, vector<1x8x128xf32>
    %193 = vector.shape_cast %192 : vector<1x8x128xf32> to vector<8x128xf32>
    %194 = vector.shape_cast %188 : vector<8x128xf32> to vector<1x8x128xf32>
    tpu.vector_store %arg3[%c12, %c0_66, %c0_67], %194 {strides = array<i32>} : memref<16x8x128xf32, #tpu.memory_space<vmem>>, vector<1x8x128xf32>,
    %cst_68 = arith.constant 0.333333343 : f32
    %195 = vector.broadcast %cst_68 : f32 to vector<8x128xf32>
    %196 = arith.mulf %104, %195 : vector<8x128xf32>
    %cst_69 = arith.constant -5.000000e+00 : f32
    %cst_70 = arith.constant 5.000000e+00 : f32
    %197 = vector.broadcast %cst_69 : f32 to vector<8x128xf32>
    %198 = arith.maximumf %197, %196 : vector<8x128xf32>
    %199 = vector.broadcast %cst_70 : f32 to vector<8x128xf32>
    %200 = arith.minimumf %199, %198 : vector<8x128xf32>
    %c4 = arith.constant 4 : index
    %c0_71 = arith.constant 0 : index
    %c0_72 = arith.constant 0 : index
    %201 = vector.load %arg3[%c4, %c0_71, %c0_72] : memref<16x8x128xf32, #tpu.memory_space<vmem>>, vector<1x8x128xf32>
    %202 = vector.shape_cast %201 : vector<1x8x128xf32> to vector<8x128xf32>
    %203 = vector.shape_cast %200 : vector<8x128xf32> to vector<1x8x128xf32>
    tpu.vector_store %arg3[%c4, %c0_71, %c0_72], %203 {strides = array<i32>} : memref<16x8x128xf32, #tpu.memory_space<vmem>>, vector<1x8x128xf32>,
    %c13 = arith.constant 13 : index
    %c0_73 = arith.constant 0 : index
    %c0_74 = arith.constant 0 : index
    %204 = vector.load %arg3[%c13, %c0_73, %c0_74] : memref<16x8x128xf32, #tpu.memory_space<vmem>>, vector<1x8x128xf32>
    %205 = vector.shape_cast %204 : vector<1x8x128xf32> to vector<8x128xf32>
    %206 = vector.shape_cast %200 : vector<8x128xf32> to vector<1x8x128xf32>
    tpu.vector_store %arg3[%c13, %c0_73, %c0_74], %206 {strides = array<i32>} : memref<16x8x128xf32, #tpu.memory_space<vmem>>, vector<1x8x128xf32>,
    %cst_75 = arith.constant 2.500000e-01 : f32
    %207 = vector.broadcast %cst_75 : f32 to vector<8x128xf32>
    %208 = arith.mulf %127, %207 : vector<8x128xf32>
    %cst_76 = arith.constant -5.000000e+00 : f32
    %cst_77 = arith.constant 5.000000e+00 : f32
    %209 = vector.broadcast %cst_76 : f32 to vector<8x128xf32>
    %210 = arith.maximumf %209, %208 : vector<8x128xf32>
    %211 = vector.broadcast %cst_77 : f32 to vector<8x128xf32>
    %212 = arith.minimumf %211, %210 : vector<8x128xf32>
    %c5 = arith.constant 5 : index
    %c0_78 = arith.constant 0 : index
    %c0_79 = arith.constant 0 : index
    %213 = vector.load %arg3[%c5, %c0_78, %c0_79] : memref<16x8x128xf32, #tpu.memory_space<vmem>>, vector<1x8x128xf32>
    %214 = vector.shape_cast %213 : vector<1x8x128xf32> to vector<8x128xf32>
    %215 = vector.shape_cast %212 : vector<8x128xf32> to vector<1x8x128xf32>
    tpu.vector_store %arg3[%c5, %c0_78, %c0_79], %215 {strides = array<i32>} : memref<16x8x128xf32, #tpu.memory_space<vmem>>, vector<1x8x128xf32>,
    %c14 = arith.constant 14 : index
    %c0_80 = arith.constant 0 : index
    %c0_81 = arith.constant 0 : index
    %216 = vector.load %arg3[%c14, %c0_80, %c0_81] : memref<16x8x128xf32, #tpu.memory_space<vmem>>, vector<1x8x128xf32>
    %217 = vector.shape_cast %216 : vector<1x8x128xf32> to vector<8x128xf32>
    %218 = vector.shape_cast %212 : vector<8x128xf32> to vector<1x8x128xf32>
    tpu.vector_store %arg3[%c14, %c0_80, %c0_81], %218 {strides = array<i32>} : memref<16x8x128xf32, #tpu.memory_space<vmem>>, vector<1x8x128xf32>,
    %cst_82 = arith.constant 0.0833333358 : f32
    %219 = vector.broadcast %cst_82 : f32 to vector<8x128xf32>
    %220 = arith.mulf %150, %219 : vector<8x128xf32>
    %cst_83 = arith.constant -5.000000e+00 : f32
    %cst_84 = arith.constant 5.000000e+00 : f32
    %221 = vector.broadcast %cst_83 : f32 to vector<8x128xf32>
    %222 = arith.maximumf %221, %220 : vector<8x128xf32>
    %223 = vector.broadcast %cst_84 : f32 to vector<8x128xf32>
    %224 = arith.minimumf %223, %222 : vector<8x128xf32>
    %c6 = arith.constant 6 : index
    %c0_85 = arith.constant 0 : index
    %c0_86 = arith.constant 0 : index
    %225 = vector.load %arg3[%c6, %c0_85, %c0_86] : memref<16x8x128xf32, #tpu.memory_space<vmem>>, vector<1x8x128xf32>
    %226 = vector.shape_cast %225 : vector<1x8x128xf32> to vector<8x128xf32>
    %227 = vector.shape_cast %224 : vector<8x128xf32> to vector<1x8x128xf32>
    tpu.vector_store %arg3[%c6, %c0_85, %c0_86], %227 {strides = array<i32>} : memref<16x8x128xf32, #tpu.memory_space<vmem>>, vector<1x8x128xf32>,
    %c15 = arith.constant 15 : index
    %c0_87 = arith.constant 0 : index
    %c0_88 = arith.constant 0 : index
    %228 = vector.load %arg3[%c15, %c0_87, %c0_88] : memref<16x8x128xf32, #tpu.memory_space<vmem>>, vector<1x8x128xf32>
    %229 = vector.shape_cast %228 : vector<1x8x128xf32> to vector<8x128xf32>
    %230 = vector.shape_cast %224 : vector<8x128xf32> to vector<1x8x128xf32>
    tpu.vector_store %arg3[%c15, %c0_87, %c0_88], %230 {strides = array<i32>} : memref<16x8x128xf32, #tpu.memory_space<vmem>>, vector<1x8x128xf32>,
    %cst_89 = arith.constant 2.500000e-01 : f32
    %231 = vector.broadcast %cst_89 : f32 to vector<8x128xf32>
    %232 = arith.mulf %102, %231 : vector<8x128xf32>
    %cst_90 = arith.constant -5.000000e+00 : f32
    %cst_91 = arith.constant 5.000000e+00 : f32
    %233 = vector.broadcast %cst_90 : f32 to vector<8x128xf32>
    %234 = arith.maximumf %233, %232 : vector<8x128xf32>
    %235 = vector.broadcast %cst_91 : f32 to vector<8x128xf32>
    %236 = arith.minimumf %235, %234 : vector<8x128xf32>
    %c7 = arith.constant 7 : index
    %c0_92 = arith.constant 0 : index
    %c0_93 = arith.constant 0 : index
    %237 = vector.load %arg3[%c7, %c0_92, %c0_93] : memref<16x8x128xf32, #tpu.memory_space<vmem>>, vector<1x8x128xf32>
    %238 = vector.shape_cast %237 : vector<1x8x128xf32> to vector<8x128xf32>
    %239 = vector.shape_cast %236 : vector<8x128xf32> to vector<1x8x128xf32>
    tpu.vector_store %arg3[%c7, %c0_92, %c0_93], %239 {strides = array<i32>} : memref<16x8x128xf32, #tpu.memory_space<vmem>>, vector<1x8x128xf32>,
    %240 = vector.extract_strided_slice %1 {offsets = [0, 0], sizes = [8, 128], strides = [1, 1]} : vector<12x132xf32> to vector<8x128xf32>
    %cst_94 = arith.constant 0.000000e+00 : f32
    %241 = vector.broadcast %cst_94 : f32 to vector<8x128xf32>
    %242 = arith.subf %241, %240 : vector<8x128xf32>
    %243 = vector.extract_strided_slice %1 {offsets = [0, 1], sizes = [8, 128], strides = [1, 1]} : vector<12x132xf32> to vector<8x128xf32>
    %cst_95 = arith.constant 2.000000e+00 : f32
    %244 = vector.broadcast %cst_95 : f32 to vector<8x128xf32>
    %245 = arith.mulf %244, %243 : vector<8x128xf32>
    %246 = arith.addf %242, %245 : vector<8x128xf32>
    %247 = vector.extract_strided_slice %1 {offsets = [0, 2], sizes = [8, 128], strides = [1, 1]} : vector<12x132xf32> to vector<8x128xf32>
    %cst_96 = arith.constant -2.000000e+00 : f32
    %248 = vector.broadcast %cst_96 : f32 to vector<8x128xf32>
    %249 = arith.mulf %248, %247 : vector<8x128xf32>
    %250 = arith.addf %246, %249 : vector<8x128xf32>
    %251 = vector.extract_strided_slice %1 {offsets = [0, 3], sizes = [8, 128], strides = [1, 1]} : vector<12x132xf32> to vector<8x128xf32>
    %cst_97 = arith.constant 2.000000e+00 : f32
    %252 = vector.broadcast %cst_97 : f32 to vector<8x128xf32>
    %253 = arith.mulf %252, %251 : vector<8x128xf32>
    %254 = arith.addf %250, %253 : vector<8x128xf32>
    %255 = vector.extract_strided_slice %1 {offsets = [0, 4], sizes = [8, 128], strides = [1, 1]} : vector<12x132xf32> to vector<8x128xf32>
    %256 = arith.subf %254, %255 : vector<8x128xf32>
    %257 = vector.extract_strided_slice %1 {offsets = [1, 0], sizes = [8, 128], strides = [1, 1]} : vector<12x132xf32> to vector<8x128xf32>
    %cst_98 = arith.constant 2.000000e+00 : f32
    %258 = vector.broadcast %cst_98 : f32 to vector<8x128xf32>
    %259 = arith.mulf %258, %257 : vector<8x128xf32>
    %260 = arith.addf %256, %259 : vector<8x128xf32>
    %261 = vector.extract_strided_slice %1 {offsets = [1, 1], sizes = [8, 128], strides = [1, 1]} : vector<12x132xf32> to vector<8x128xf32>
    %cst_99 = arith.constant -6.000000e+00 : f32
    %262 = vector.broadcast %cst_99 : f32 to vector<8x128xf32>
    %263 = arith.mulf %262, %261 : vector<8x128xf32>
    %264 = arith.addf %260, %263 : vector<8x128xf32>
    %265 = vector.extract_strided_slice %1 {offsets = [1, 2], sizes = [8, 128], strides = [1, 1]} : vector<12x132xf32> to vector<8x128xf32>
    %cst_100 = arith.constant 8.000000e+00 : f32
    %266 = vector.broadcast %cst_100 : f32 to vector<8x128xf32>
    %267 = arith.mulf %266, %265 : vector<8x128xf32>
    %268 = arith.addf %264, %267 : vector<8x128xf32>
    %269 = vector.extract_strided_slice %1 {offsets = [1, 3], sizes = [8, 128], strides = [1, 1]} : vector<12x132xf32> to vector<8x128xf32>
    %cst_101 = arith.constant -6.000000e+00 : f32
    %270 = vector.broadcast %cst_101 : f32 to vector<8x128xf32>
    %271 = arith.mulf %270, %269 : vector<8x128xf32>
    %272 = arith.addf %268, %271 : vector<8x128xf32>
    %273 = vector.extract_strided_slice %1 {offsets = [1, 4], sizes = [8, 128], strides = [1, 1]} : vector<12x132xf32> to vector<8x128xf32>
    %cst_102 = arith.constant 2.000000e+00 : f32
    %274 = vector.broadcast %cst_102 : f32 to vector<8x128xf32>
    %275 = arith.mulf %274, %273 : vector<8x128xf32>
    %276 = arith.addf %272, %275 : vector<8x128xf32>
    %277 = vector.extract_strided_slice %1 {offsets = [2, 0], sizes = [8, 128], strides = [1, 1]} : vector<12x132xf32> to vector<8x128xf32>
    %cst_103 = arith.constant -2.000000e+00 : f32
    %278 = vector.broadcast %cst_103 : f32 to vector<8x128xf32>
    %279 = arith.mulf %278, %277 : vector<8x128xf32>
    %280 = arith.addf %276, %279 : vector<8x128xf32>
    %281 = vector.extract_strided_slice %1 {offsets = [2, 1], sizes = [8, 128], strides = [1, 1]} : vector<12x132xf32> to vector<8x128xf32>
    %cst_104 = arith.constant 8.000000e+00 : f32
    %282 = vector.broadcast %cst_104 : f32 to vector<8x128xf32>
    %283 = arith.mulf %282, %281 : vector<8x128xf32>
    %284 = arith.addf %280, %283 : vector<8x128xf32>
    %285 = vector.extract_strided_slice %1 {offsets = [2, 2], sizes = [8, 128], strides = [1, 1]} : vector<12x132xf32> to vector<8x128xf32>
    %cst_105 = arith.constant -1.200000e+01 : f32
    %286 = vector.broadcast %cst_105 : f32 to vector<8x128xf32>
    %287 = arith.mulf %286, %285 : vector<8x128xf32>
    %288 = arith.addf %284, %287 : vector<8x128xf32>
    %289 = vector.extract_strided_slice %1 {offsets = [2, 3], sizes = [8, 128], strides = [1, 1]} : vector<12x132xf32> to vector<8x128xf32>
    %cst_106 = arith.constant 8.000000e+00 : f32
    %290 = vector.broadcast %cst_106 : f32 to vector<8x128xf32>
    %291 = arith.mulf %290, %289 : vector<8x128xf32>
    %292 = arith.addf %288, %291 : vector<8x128xf32>
    %293 = vector.extract_strided_slice %1 {offsets = [2, 4], sizes = [8, 128], strides = [1, 1]} : vector<12x132xf32> to vector<8x128xf32>
    %cst_107 = arith.constant -2.000000e+00 : f32
    %294 = vector.broadcast %cst_107 : f32 to vector<8x128xf32>
    %295 = arith.mulf %294, %293 : vector<8x128xf32>
    %296 = arith.addf %292, %295 : vector<8x128xf32>
    %cst_108 = arith.constant 0.0833333358 : f32
    %297 = vector.broadcast %cst_108 : f32 to vector<8x128xf32>
    %298 = arith.mulf %296, %297 : vector<8x128xf32>
    %cst_109 = arith.constant -5.000000e+00 : f32
    %cst_110 = arith.constant 5.000000e+00 : f32
    %299 = vector.broadcast %cst_109 : f32 to vector<8x128xf32>
    %300 = arith.maximumf %299, %298 : vector<8x128xf32>
    %301 = vector.broadcast %cst_110 : f32 to vector<8x128xf32>
    %302 = arith.minimumf %301, %300 : vector<8x128xf32>
    %c8 = arith.constant 8 : index
    %c0_111 = arith.constant 0 : index
    %c0_112 = arith.constant 0 : index
    %303 = vector.load %arg3[%c8, %c0_111, %c0_112] : memref<16x8x128xf32, #tpu.memory_space<vmem>>, vector<1x8x128xf32>
    %304 = vector.shape_cast %303 : vector<1x8x128xf32> to vector<8x128xf32>
    %305 = vector.shape_cast %302 : vector<8x128xf32> to vector<1x8x128xf32>
    tpu.vector_store %arg3[%c8, %c0_111, %c0_112], %305 {strides = array<i32>} : memref<16x8x128xf32, #tpu.memory_space<vmem>>, vector<1x8x128xf32>,
    return
  }
  func.func @transform_0(%arg0: i32, %arg1: i32) -> (i32, i32, i32, i32) {
    %c0_i32 = arith.constant 0 : i32
    %c0_i32_0 = arith.constant 0 : i32
    %c0_i32_1 = arith.constant 0 : i32
    return %arg0, %arg1, %c0_i32, %c0_i32_0 : i32, i32, i32, i32
  }
  func.func @transform_1(%arg0: i32, %arg1: i32) -> (i32, i32, i32) {
    %c0_i32 = arith.constant 0 : i32
    %c0_i32_0 = arith.constant 0 : i32
    return %c0_i32, %arg0, %arg1 : i32, i32, i32
  }
}

</mosaic_0001>

<llo_original>
// kernel: tpu_custom_call.1
$region0: #{tpu_custom_call.1}
  #allocation0 [shape = 'u32[]', space=smem, size = 0x4, offset = 0x4, fixed_abs, tag = 'smem constant byte address 0x4 - core index']
  #allocation1 [shape = 'u32[144,128]{1,0:T(1,128)}', space=vmem, size = 0x12000, scoped, tag = 'internal scratch']
  %s0 = inlined_call_operand.vmem [shape: f32[2,1,12,132], index: 0, kind: input, shape index: {}]
  %s1 = inlined_call_operand.hbm [shape: f32[16,16,128], index: 1, kind: output, shape index: {}]
  %s2 = sld [smem:[#allocation0]]
  $region37: #{tpu_custom_call.1} parent=0
    _
  %s4 = ssub.s32 1, %s2
  %s5 = scalar_select 0, %s4, %s2
  $region1: #{tpu_custom_call.1} parent=0
    #allocation2 [shape = 'u8[131072]{0}', space=vmem, size = 0x20000, scoped, tag = 'output window, operand 0']
    #allocation3 [shape = 's32[2]{0}', space=sflag, size = 0x8, scoped, tag = 'scoped memory for tpu_custom_call.1']
    %6 = vsyncpa [#allocation3], 0
    %s7 = scalar_lea.sflag [#allocation3], 1
    %8 = vsyncpa %s7, 0
    loop: start=0, step=1, limit=4
    $region2: #{tpu_custom_call.1} parent=1 // loop_pre_header
      _
    $region3: #{tpu_custom_call.1} parent=1 // loop_header
      %s10 = sphi 0, %s14
      %p11 = scmp.ge.s32.totalorder %s10, 4
      %s17 = sphi 0, %s29
      %s18 = sphi 0, %s25
      %s19 = sphi 0, %s17
      %s20 = sphi 0, %s18
      %s21 = sphi 0, %s19
      %s22 = sphi 0, %s20
      %s34 = sphi 0, %s36
      %s37 = sphi 0, %s34
      %s38 = sphi 0, %s37
      %s54 = sphi 0, %s38
      %s62 = sphi 0, %s64
      %s65 = sphi 0, %s62
      %s66 = sphi 0, %s65
      %s82 = sphi 0, %s66
    $region4: #{tpu_custom_call.1} parent=1 // loop_header_branch
      %13 = sbr.rel (%p11) target = $region8
    $region5: #{tpu_custom_call.1} parent=1 // loop_body
      %s15 = ssub.s32 %s10, 1
      %s16 = ssub.s32 %s10, 2
      %s23 = sadd.s32 1, %s18
      %p24 = scmp.ge.s32.totalorder %s23, 1
      %s25 = scalar_select %p24, 0, %s23
      %s26 = sadd.s32 1, %s17
      %s27 = scalar_select %p24, %s26, %s17
      %p28 = scmp.ge.s32.totalorder %s27, 2
      %s29 = scalar_select %p28, 0, %s27
      %s30 = ssub.s32 %s17, %s29
      %s31 = ssub.s32 %s18, %s25
      %s32 = sor.u32 %s30, %s31
      %p33 = scmp.eq.s32.totalorder %s32, 0
      %s35 = sadd.s32 %s34, 1
      %s36 = scalar_select %p33, %s34, %s35
      %p39 = pneg %p33
      %p40 = scmp.eq.s32.totalorder %s10, 1
      %p41 = por %p39, %p40
      %p42 = scmp.ne.s32.totalorder %s34, %s37
      %p43 = scmp.eq.s32.totalorder %s10, 0
      %p44 = por %p42, %p43
      %p45 = scmp.ne.s32.totalorder %s34, %s37
      %p46 = scmp.eq.s32.totalorder %s15, 1
      %p47 = por %p45, %p46
      %p48 = scmp.ne.s32.totalorder %s37, %s38
      %p49 = scmp.eq.s32.totalorder %s15, 0
      %p50 = por %p48, %p49
      %p51 = scmp.ne.s32.totalorder %s37, %s38
      %p52 = scmp.eq.s32.totalorder %s16, 1
      %p53 = por %p51, %p52
      %p55 = scmp.ne.s32.totalorder %s38, %s54
      %p56 = scmp.eq.s32.totalorder %s16, 0
      %p57 = por %p55, %p56
      %s58 = ssub.s32 %s17, %s29
      %s59 = ssub.s32 %s18, %s25
      %s60 = sor.u32 %s58, %s59
      %p61 = scmp.eq.s32.totalorder %s60, 0
      %s63 = sadd.s32 %s62, 1
      %s64 = scalar_select %p61, %s62, %s63
      %p67 = pneg %p61
      %p68 = scmp.eq.s32.totalorder %s10, 1
      %p69 = por %p67, %p68
      %p70 = scmp.ne.s32.totalorder %s62, %s65
      %p71 = scmp.eq.s32.totalorder %s10, 0
      %p72 = por %p70, %p71
      %p73 = scmp.ne.s32.totalorder %s62, %s65
      %p74 = scmp.eq.s32.totalorder %s15, 1
      %p75 = por %p73, %p74
      %p76 = scmp.ne.s32.totalorder %s65, %s66
      %p77 = scmp.eq.s32.totalorder %s15, 0
      %p78 = por %p76, %p77
      %p79 = scmp.ne.s32.totalorder %s65, %s66
      %p80 = scmp.eq.s32.totalorder %s16, 1
      %p81 = por %p79, %p80
      %p83 = scmp.ne.s32.totalorder %s66, %s82
      %p84 = scmp.eq.s32.totalorder %s16, 0
      %p85 = por %p83, %p84
      %p86 = scmp.le.s32.totalorder 1, %s10
      %p87 = scmp.lt.s32.totalorder %s10, 3
      %p88 = pnand %p86, %p87
      %p89 = pneg %p88
      // Predicated region
      $region9: #{tpu_custom_call.1} parent=5 // pred_check
        _
      $region10: #{tpu_custom_call.1} parent=5 // pred_check_branch
        %91 = sbr.rel (%p88) target = $region12
      $region11: #{tpu_custom_call.1} parent=5 // pred_region
        %s92 = ssub.s32 %s10, 1
      $region12: #{tpu_custom_call.1} parent=5 // pred_fallthru
        _
      %p93 = scmp.lt.s32.totalorder %s10, 2
      // Predicated region
      $region13: #{tpu_custom_call.1} parent=5 // pred_check
        %p94 = pneg %p93
      $region14: #{tpu_custom_call.1} parent=5 // pred_check_branch
        %96 = sbr.rel (%p94) target = $region16
      $region15: #{tpu_custom_call.1} parent=5 // pred_region
        // Predicated region
        $region17: #{tpu_custom_call.1} parent=15 // pred_check
          %p97 = pneg %p44
        $region18: #{tpu_custom_call.1} parent=15 // pred_check_branch
          %99 = sbr.rel (%p97) target = $region20
        $region19: #{tpu_custom_call.1} parent=15 // pred_region
          %p100 = scmp.lt.s32.totalorder %s17, 1
          %s101 = scalar_select %p100, %s17, 1
          %p102 = scmp.lt.s32.totalorder %s18, 0
          %s103 = scalar_select %p102, %s18, 0
          %s104 = smul.addr %s103, 4
          %s105 = smul.addr %s101, 4
          %s106 = sadd.s32 %s104, %s105
          %s107 = smul.addr %s106, 8
          %s108 = scalar_lea.vmem %s0, %s107
        $region20: #{tpu_custom_call.1} parent=15 // pred_fallthru
          _
      $region16: #{tpu_custom_call.1} parent=5 // pred_fallthru
        _
      %p109 = scmp.le.s32.totalorder 1, %s10
      %p110 = scmp.lt.s32.totalorder %s10, 3
      %p111 = pnand %p109, %p110
      %p112 = pneg %p111
      // Predicated region
      $region21: #{tpu_custom_call.1} parent=5 // pred_check
        _
      $region22: #{tpu_custom_call.1} parent=5 // pred_check_branch
        %114 = sbr.rel (%p111) target = $region24
      $region23: #{tpu_custom_call.1} parent=5 // pred_region
        %s115 = ssub.s32 %s10, 1
        %p116 = scmp.lt.s32.totalorder %s19, 1
        %s117 = scalar_select %p116, %s19, 1
        %p118 = scmp.lt.s32.totalorder %s20, 0
        %s119 = scalar_select %p118, %s20, 0
        %s120 = smul.addr %s119, 4
        %s121 = smul.addr %s117, 4
        %s122 = sadd.s32 %s120, %s121
        %s123 = smul.addr %s122, 8
        %s124 = scalar_lea.vmem %s0, %s123
        %p125 = pneg %p50
        %p126 = pneg %p47
        %p127 = pneg %p78
        %p128 = pneg %p75
        %s129 = sand.u32 %s65, 1
        %s130 = scalar_lea.sflag [#allocation3], %s129
        %s131 = sand.u32 %s65, 1
        %s132 = smul.addr %s131, 128
        %s133 = scalar_lea.vmem [#allocation2], %s132
        %p134 = scmp.lt.s32.totalorder %s19, 1
        %s135 = scalar_select %p134, %s19, 1
        %p136 = scmp.lt.s32.totalorder %s20, 0
        %s137 = scalar_select %p136, %s20, 0
        %s138 = smul.addr %s137, 4
        %s139 = smul.addr %s135, 4
        %s140 = sadd.s32 %s138, %s139
        %s141 = smul.addr %s140, 8
        %s142 = scalar_lea.vmem %s0, %s141
        %v143 = vld [vmem:[%s142] sm:$0xff]
        %v144 = vld [vmem:[%s142 + $0x8] sm:$0xff]
        %v145 = vld [vmem:[%s142 + $0x10] sm:$0xf]
        %v146 = vld [vmem:[%s142 + $0x18] sm:$0xf]
        %v147 = vsub.f32 0.0, %v143
        %v148 = vmul.f32 %v143, 2.0
        %v149 = vmul.f32 %v144, 2.0
        %152 = vrot.lane.b32.xlu0 %v148, 127
        %v153 = vpop.permute.xlu0 %152
        %154 = vrot.lane.b32.xlu0 %v149, 127
        %v155 = vpop.permute.xlu0 %154
        %vm156 = vcmask 1039360
        %v157 = vsel %vm156, %v153, %v155
        %v159 = vadd.f32 %v147, %v157
        %v160 = vmul.f32 %v143, -2.0
        %v161 = vmul.f32 %v144, -2.0
        %164 = vrot.lane.b32.xlu0 %v160, 126
        %v165 = vpop.permute.xlu0 %164
        %166 = vrot.lane.b32.xlu0 %v161, 126
        %v167 = vpop.permute.xlu0 %166
        %vm168 = vcmask 1031168
        %v169 = vsel %vm168, %v165, %v167
        %v171 = vadd.f32 %v159, %v169
        %172 = vrot.lane.b32.xlu0 %v148, 125
        %v173 = vpop.permute.xlu0 %172
        %174 = vrot.lane.b32.xlu0 %v149, 125
        %v175 = vpop.permute.xlu0 %174
        %vm176 = vcmask 1022976
        %v177 = vsel %vm176, %v173, %v175
        %v179 = vadd.f32 %v171, %v177
        %182 = vrot.lane.b32.xlu0 %v143, 124
        %v183 = vpop.permute.xlu0 %182
        %184 = vrot.lane.b32.xlu0 %v144, 124
        %v185 = vpop.permute.xlu0 %184
        %vm186 = vcmask 1014784
        %v187 = vsel %vm186, %v183, %v185
        %v189 = vsub.f32 %v179, %v187
        %v190 = vmul.f32 %v145, 2.0
        %vm192 = vcmask 1046528
        %v193 = vrot.slane %v148, 1
        %v194 = vrot.slane %v190, 1
        %v195 = vsel %vm192, %v193, %v194
        %v197 = vadd.f32 %v189, %v195
        %v198 = vsub.f32 0.0, %v144
        %v199 = vsub.f32 0.0, %v145
        %v200 = vsub.f32 0.0, %v146
        %v201 = vmul.f32 %v143, -6.0
        %v202 = vmul.f32 %v144, -6.0
        %v203 = vmul.f32 %v145, -6.0
        %v204 = vmul.f32 %v146, -6.0
        %v209 = vrot.slane %v201, 1
        %v210 = vrot.slane %v203, 1
        %v211 = vsel %vm192, %v209, %v210
        %v212 = vrot.slane %v202, 1
        %v213 = vrot.slane %v204, 1
        %v214 = vsel %vm192, %v212, %v213
        %215 = vrot.lane.b32.xlu0 %v211, 127
        %v216 = vpop.permute.xlu0 %215
        %217 = vrot.lane.b32.xlu0 %v214, 127
        %v218 = vpop.permute.xlu0 %217
        %v219 = vsel %vm156, %v216, %v218
        %v221 = vadd.f32 %v197, %v219
        %v222 = vmul.f32 %v146, 2.0
        %224 = vrot.lane.b32.xlu0 %v190, 127
        %v225 = vpop.permute.xlu0 %224
        %226 = vrot.lane.b32.xlu0 %v222, 127
        %v227 = vpop.permute.xlu0 %226
        %v228 = vsel %vm156, %v225, %v227
        %v232 = vadd.f32 %v198, %v155
        %v233 = vadd.f32 %v199, %v228
        %v234 = vadd.f32 %v200, %v227
        %v235 = vmul.f32 %v143, 8.0
        %v236 = vmul.f32 %v144, 8.0
        %v237 = vmul.f32 %v145, 8.0
        %v238 = vmul.f32 %v146, 8.0
        %v243 = vrot.slane %v235, 1
        %v244 = vrot.slane %v237, 1
        %v245 = vsel %vm192, %v243, %v244
        %v246 = vrot.slane %v236, 1
        %v247 = vrot.slane %v238, 1
        %v248 = vsel %vm192, %v246, %v247
        %249 = vrot.lane.b32.xlu0 %v245, 126
        %v250 = vpop.permute.xlu0 %249
        %251 = vrot.lane.b32.xlu0 %v248, 126
        %v252 = vpop.permute.xlu0 %251
        %v253 = vsel %vm168, %v250, %v252
        %v255 = vadd.f32 %v221, %v253
        %258 = vrot.lane.b32.xlu0 %v143, 126
        %v259 = vpop.permute.xlu0 %258
        %260 = vrot.lane.b32.xlu0 %v144, 126
        %v261 = vpop.permute.xlu0 %260
        %262 = vrot.lane.b32.xlu0 %v145, 126
        %v263 = vpop.permute.xlu0 %262
        %264 = vrot.lane.b32.xlu0 %v146, 126
        %v265 = vpop.permute.xlu0 %264
        %v266 = vsel %vm168, %v259, %v261
        %v267 = vsel %vm168, %v263, %v265
        %v272 = vsub.f32 %v159, %v266
        %v273 = vsub.f32 %v232, %v261
        %v274 = vsub.f32 %v233, %v267
        %v275 = vsub.f32 %v234, %v265
        %276 = vrot.lane.b32.xlu0 %v211, 125
        %v277 = vpop.permute.xlu0 %276
        %278 = vrot.lane.b32.xlu0 %v214, 125
        %v279 = vpop.permute.xlu0 %278
        %v280 = vsel %vm176, %v277, %v279
        %v282 = vadd.f32 %v255, %v280
        %v283 = vrot.slane %v149, 1
        %v284 = vrot.slane %v222, 1
        %v285 = vsel %vm192, %v283, %v284
        %286 = vrot.lane.b32.xlu0 %v195, 124
        %v287 = vpop.permute.xlu0 %286
        %288 = vrot.lane.b32.xlu0 %v285, 124
        %v289 = vpop.permute.xlu0 %288
        %v290 = vsel %vm186, %v287, %v289
        %v292 = vadd.f32 %v282, %v290
        %v293 = vmul.f32 %v145, -2.0
        %vm295 = vcmask 1045504
        %v296 = vrot.slane %v160, 2
        %v297 = vrot.slane %v293, 2
        %v298 = vsel %vm295, %v296, %v297
        %v300 = vadd.f32 %v292, %v298
        %v304 = vadd.f32 %v272, %v195
        %v305 = vadd.f32 %v273, %v285
        %v306 = vadd.f32 %v274, %v194
        %v307 = vadd.f32 %v275, %v284
        %v308 = vrot.slane %v235, 2
        %v309 = vrot.slane %v237, 2
        %v310 = vsel %vm295, %v308, %v309
        %v311 = vrot.slane %v236, 2
        %v312 = vrot.slane %v238, 2
        %v313 = vsel %vm295, %v311, %v312
        %314 = vrot.lane.b32.xlu0 %v310, 127
        %v315 = vpop.permute.xlu0 %314
        %316 = vrot.lane.b32.xlu0 %v313, 127
        %v317 = vpop.permute.xlu0 %316
        %v318 = vsel %vm156, %v315, %v317
        %v320 = vadd.f32 %v300, %v318
        %v321 = vmul.f32 %v146, -2.0
        %323 = vrot.lane.b32.xlu0 %v160, 127
        %v324 = vpop.permute.xlu0 %323
        %325 = vrot.lane.b32.xlu0 %v161, 127
        %v326 = vpop.permute.xlu0 %325
        %327 = vrot.lane.b32.xlu0 %v293, 127
        %v328 = vpop.permute.xlu0 %327
        %329 = vrot.lane.b32.xlu0 %v321, 127
        %v330 = vpop.permute.xlu0 %329
        %v331 = vsel %vm156, %v324, %v326
        %v332 = vsel %vm156, %v328, %v330
        %v337 = vadd.f32 %v143, %v331
        %v338 = vadd.f32 %v144, %v326
        %v339 = vadd.f32 %v145, %v332
        %v340 = vadd.f32 %v146, %v330
        %v341 = vrot.slane %v160, 1
        %v342 = vrot.slane %v293, 1
        %v343 = vsel %vm192, %v341, %v342
        %v344 = vrot.slane %v161, 1
        %v345 = vrot.slane %v321, 1
        %v346 = vsel %vm192, %v344, %v345
        %v351 = vadd.f32 %v143, %v343
        %v352 = vadd.f32 %v144, %v346
        %v353 = vadd.f32 %v145, %v342
        %v354 = vadd.f32 %v146, %v345
        %v355 = vmul.f32 %v143, -3.0
        %v356 = vmul.f32 %v144, -3.0
        %v357 = vmul.f32 %v145, -3.0
        %v358 = vmul.f32 %v146, -3.0
        %363 = vrot.lane.b32.xlu0 %v355, 127
        %v364 = vpop.permute.xlu0 %363
        %365 = vrot.lane.b32.xlu0 %v356, 127
        %v366 = vpop.permute.xlu0 %365
        %367 = vrot.lane.b32.xlu0 %v357, 127
        %v368 = vpop.permute.xlu0 %367
        %369 = vrot.lane.b32.xlu0 %v358, 127
        %v370 = vpop.permute.xlu0 %369
        %v371 = vsel %vm156, %v364, %v366
        %v372 = vsel %vm156, %v368, %v370
        %v377 = vadd.f32 %v143, %v371
        %v378 = vadd.f32 %v144, %v366
        %v379 = vadd.f32 %v145, %v372
        %v380 = vadd.f32 %v146, %v370
        %v381 = vmul.f32 %v143, -4.0
        %v382 = vmul.f32 %v144, -4.0
        %v383 = vmul.f32 %v145, -4.0
        %v384 = vmul.f32 %v146, -4.0
        %v389 = vrot.slane %v381, 1
        %v390 = vrot.slane %v383, 1
        %v391 = vsel %vm192, %v389, %v390
        %v392 = vrot.slane %v382, 1
        %v393 = vrot.slane %v384, 1
        %v394 = vsel %vm192, %v392, %v393
        %395 = vrot.lane.b32.xlu0 %v391, 127
        %v396 = vpop.permute.xlu0 %395
        %397 = vrot.lane.b32.xlu0 %v394, 127
        %v398 = vpop.permute.xlu0 %397
        %399 = vrot.lane.b32.xlu0 %v390, 127
        %v400 = vpop.permute.xlu0 %399
        %401 = vrot.lane.b32.xlu0 %v393, 127
        %v402 = vpop.permute.xlu0 %401
        %v403 = vsel %vm156, %v396, %v398
        %v404 = vsel %vm156, %v400, %v402
        %v409 = vadd.f32 %v304, %v403
        %v410 = vadd.f32 %v305, %v398
        %v411 = vadd.f32 %v306, %v404
        %v412 = vadd.f32 %v307, %v402
        %v413 = vmul.f32 %v143, -12.0
        %v414 = vmul.f32 %v144, -12.0
        %v415 = vmul.f32 %v145, -12.0
        %v416 = vmul.f32 %v146, -12.0
        %v421 = vrot.slane %v413, 2
        %v422 = vrot.slane %v415, 2
        %v423 = vsel %vm295, %v421, %v422
        %v424 = vrot.slane %v414, 2
        %v425 = vrot.slane %v416, 2
        %v426 = vsel %vm295, %v424, %v425
        %427 = vrot.lane.b32.xlu0 %v423, 126
        %v428 = vpop.permute.xlu0 %427
        %429 = vrot.lane.b32.xlu0 %v426, 126
        %v430 = vpop.permute.xlu0 %429
        %v431 = vsel %vm168, %v428, %v430
        %v433 = vadd.f32 %v320, %v431
        %434 = vrot.lane.b32.xlu0 %v143, 127
        %v435 = vpop.permute.xlu0 %434
        %436 = vrot.lane.b32.xlu0 %v144, 127
        %v437 = vpop.permute.xlu0 %436
        %438 = vrot.lane.b32.xlu0 %v145, 127
        %v439 = vpop.permute.xlu0 %438
        %440 = vrot.lane.b32.xlu0 %v146, 127
        %v441 = vpop.permute.xlu0 %440
        %v442 = vsel %vm156, %v435, %v437
        %v443 = vsel %vm156, %v439, %v441
        %v448 = vadd.f32 %v147, %v442
        %v449 = vadd.f32 %v198, %v437
        %v450 = vadd.f32 %v199, %v443
        %v451 = vadd.f32 %v200, %v441
        %v452 = vadd.f32 %v337, %v266
        %v453 = vadd.f32 %v338, %v261
        %v454 = vadd.f32 %v339, %v267
        %v455 = vadd.f32 %v340, %v265
        %v456 = vmul.f32 %v143, 3.0
        %v457 = vmul.f32 %v144, 3.0
        %v458 = vmul.f32 %v145, 3.0
        %v459 = vmul.f32 %v146, 3.0
        %464 = vrot.lane.b32.xlu0 %v456, 126
        %v465 = vpop.permute.xlu0 %464
        %466 = vrot.lane.b32.xlu0 %v457, 126
        %v467 = vpop.permute.xlu0 %466
        %468 = vrot.lane.b32.xlu0 %v458, 126
        %v469 = vpop.permute.xlu0 %468
        %470 = vrot.lane.b32.xlu0 %v459, 126
        %v471 = vpop.permute.xlu0 %470
        %v472 = vsel %vm168, %v465, %v467
        %v473 = vsel %vm168, %v469, %v471
        %v478 = vadd.f32 %v377, %v472
        %v479 = vadd.f32 %v378, %v467
        %v480 = vadd.f32 %v379, %v473
        %v481 = vadd.f32 %v380, %v471
        %482 = vrot.lane.b32.xlu0 %v195, 126
        %v483 = vpop.permute.xlu0 %482
        %484 = vrot.lane.b32.xlu0 %v285, 126
        %v485 = vpop.permute.xlu0 %484
        %486 = vrot.lane.b32.xlu0 %v194, 126
        %v487 = vpop.permute.xlu0 %486
        %488 = vrot.lane.b32.xlu0 %v284, 126
        %v489 = vpop.permute.xlu0 %488
        %v490 = vsel %vm168, %v483, %v485
        %v491 = vsel %vm168, %v487, %v489
        %v496 = vadd.f32 %v409, %v490
        %v497 = vadd.f32 %v410, %v485
        %v498 = vadd.f32 %v411, %v491
        %v499 = vadd.f32 %v412, %v489
        %500 = vrot.lane.b32.xlu0 %v310, 125
        %v501 = vpop.permute.xlu0 %500
        %502 = vrot.lane.b32.xlu0 %v313, 125
        %v503 = vpop.permute.xlu0 %502
        %v504 = vsel %vm176, %v501, %v503
        %v506 = vadd.f32 %v433, %v504
        %507 = vrot.lane.b32.xlu0 %v143, 125
        %v508 = vpop.permute.xlu0 %507
        %509 = vrot.lane.b32.xlu0 %v144, 125
        %v510 = vpop.permute.xlu0 %509
        %511 = vrot.lane.b32.xlu0 %v145, 125
        %v512 = vpop.permute.xlu0 %511
        %513 = vrot.lane.b32.xlu0 %v146, 125
        %v514 = vpop.permute.xlu0 %513
        %v515 = vsel %vm176, %v508, %v510
        %v516 = vsel %vm176, %v512, %v514
        %v521 = vsub.f32 %v478, %v515
        %v522 = vsub.f32 %v479, %v510
        %v523 = vsub.f32 %v480, %v516
        %v524 = vsub.f32 %v481, %v514
        %v525 = vrot.slane %v161, 2
        %v526 = vrot.slane %v321, 2
        %v527 = vsel %vm295, %v525, %v526
        %528 = vrot.lane.b32.xlu0 %v298, 124
        %v529 = vpop.permute.xlu0 %528
        %530 = vrot.lane.b32.xlu0 %v527, 124
        %v531 = vpop.permute.xlu0 %530
        %v532 = vsel %vm186, %v529, %v531
        %v534 = vadd.f32 %v506, %v532
        %vm535 = vcmask 1044480
        %v536 = vrot.slane %v148, 3
        %v537 = vrot.slane %v190, 3
        %v538 = vsel %vm535, %v536, %v537
        %v540 = vadd.f32 %v534, %v538
        %v541 = vrot.slane %v143, 2
        %v542 = vrot.slane %v145, 2
        %v543 = vsel %vm295, %v541, %v542
        %v544 = vrot.slane %v144, 2
        %v545 = vrot.slane %v146, 2
        %v546 = vsel %vm295, %v544, %v545
        %v551 = vsub.f32 %v496, %v543
        %v552 = vsub.f32 %v497, %v546
        %v553 = vsub.f32 %v498, %v542
        %v554 = vsub.f32 %v499, %v545
        %v555 = vrot.slane %v201, 3
        %v556 = vrot.slane %v203, 3
        %v557 = vsel %vm535, %v555, %v556
        %v558 = vrot.slane %v202, 3
        %v559 = vrot.slane %v204, 3
        %v560 = vsel %vm535, %v558, %v559
        %561 = vrot.lane.b32.xlu0 %v557, 127
        %v562 = vpop.permute.xlu0 %561
        %563 = vrot.lane.b32.xlu0 %v560, 127
        %v564 = vpop.permute.xlu0 %563
        %v565 = vsel %vm156, %v562, %v564
        %v567 = vadd.f32 %v540, %v565
        %v568 = vrot.slane %v143, 1
        %v569 = vrot.slane %v145, 1
        %v570 = vsel %vm192, %v568, %v569
        %v571 = vrot.slane %v144, 1
        %v572 = vrot.slane %v146, 1
        %v573 = vsel %vm192, %v571, %v572
        %v578 = vadd.f32 %v147, %v570
        %v579 = vadd.f32 %v198, %v573
        %v580 = vadd.f32 %v199, %v569
        %v581 = vadd.f32 %v200, %v572
        %v582 = vadd.f32 %v351, %v543
        %v583 = vadd.f32 %v352, %v546
        %v584 = vadd.f32 %v353, %v542
        %v585 = vadd.f32 %v354, %v545
        %v586 = vrot.slane %v148, 2
        %v587 = vrot.slane %v190, 2
        %v588 = vsel %vm295, %v586, %v587
        %v589 = vrot.slane %v149, 2
        %v590 = vrot.slane %v222, 2
        %v591 = vsel %vm295, %v589, %v590
        %592 = vrot.lane.b32.xlu0 %v588, 127
        %v593 = vpop.permute.xlu0 %592
        %594 = vrot.lane.b32.xlu0 %v591, 127
        %v595 = vpop.permute.xlu0 %594
        %596 = vrot.lane.b32.xlu0 %v587, 127
        %v597 = vpop.permute.xlu0 %596
        %598 = vrot.lane.b32.xlu0 %v590, 127
        %v599 = vpop.permute.xlu0 %598
        %v600 = vsel %vm156, %v593, %v595
        %v601 = vsel %vm156, %v597, %v599
        %v606 = vadd.f32 %v551, %v600
        %v607 = vadd.f32 %v552, %v595
        %v608 = vadd.f32 %v553, %v601
        %v609 = vadd.f32 %v554, %v599
        %v610 = vrot.slane %v235, 3
        %v611 = vrot.slane %v237, 3
        %v612 = vsel %vm535, %v610, %v611
        %v613 = vrot.slane %v236, 3
        %v614 = vrot.slane %v238, 3
        %v615 = vsel %vm535, %v613, %v614
        %616 = vrot.lane.b32.xlu0 %v612, 126
        %v617 = vpop.permute.xlu0 %616
        %618 = vrot.lane.b32.xlu0 %v615, 126
        %v619 = vpop.permute.xlu0 %618
        %v620 = vsel %vm168, %v617, %v619
        %v622 = vadd.f32 %v567, %v620
        %623 = vrot.lane.b32.xlu0 %v543, 126
        %v624 = vpop.permute.xlu0 %623
        %625 = vrot.lane.b32.xlu0 %v546, 126
        %v626 = vpop.permute.xlu0 %625
        %627 = vrot.lane.b32.xlu0 %v542, 126
        %v628 = vpop.permute.xlu0 %627
        %629 = vrot.lane.b32.xlu0 %v545, 126
        %v630 = vpop.permute.xlu0 %629
        %v631 = vsel %vm168, %v624, %v626
        %v632 = vsel %vm168, %v628, %v630
        %v637 = vsub.f32 %v606, %v631
        %v638 = vsub.f32 %v607, %v626
        %v639 = vsub.f32 %v608, %v632
        %v640 = vsub.f32 %v609, %v630
        %641 = vrot.lane.b32.xlu0 %v557, 125
        %v642 = vpop.permute.xlu0 %641
        %643 = vrot.lane.b32.xlu0 %v560, 125
        %v644 = vpop.permute.xlu0 %643
        %v645 = vsel %vm176, %v642, %v644
        %v647 = vadd.f32 %v622, %v645
        %v648 = vrot.slane %v149, 3
        %v649 = vrot.slane %v222, 3
        %v650 = vsel %vm535, %v648, %v649
        %651 = vrot.lane.b32.xlu0 %v538, 124
        %v652 = vpop.permute.xlu0 %651
        %653 = vrot.lane.b32.xlu0 %v650, 124
        %v654 = vpop.permute.xlu0 %653
        %v655 = vsel %vm186, %v652, %v654
        %v657 = vadd.f32 %v647, %v655
        %vm658 = vcmask 1043456
        %v659 = vrot.slane %v143, 4
        %v660 = vrot.slane %v145, 4
        %v661 = vsel %vm658, %v659, %v660
        %v663 = vsub.f32 %v657, %v661
        %v664 = vrot.slane %v148, 4
        %v665 = vrot.slane %v190, 4
        %v666 = vsel %vm658, %v664, %v665
        %v667 = vrot.slane %v149, 4
        %v668 = vrot.slane %v222, 4
        %v669 = vsel %vm658, %v667, %v668
        %670 = vrot.lane.b32.xlu0 %v666, 127
        %v671 = vpop.permute.xlu0 %670
        %672 = vrot.lane.b32.xlu0 %v669, 127
        %v673 = vpop.permute.xlu0 %672
        %v674 = vsel %vm156, %v671, %v673
        %v676 = vadd.f32 %v663, %v674
        %v677 = vrot.slane %v160, 4
        %v678 = vrot.slane %v293, 4
        %v679 = vsel %vm658, %v677, %v678
        %v680 = vrot.slane %v161, 4
        %v681 = vrot.slane %v321, 4
        %v682 = vsel %vm658, %v680, %v681
        %683 = vrot.lane.b32.xlu0 %v679, 126
        %v684 = vpop.permute.xlu0 %683
        %685 = vrot.lane.b32.xlu0 %v682, 126
        %v686 = vpop.permute.xlu0 %685
        %v687 = vsel %vm168, %v684, %v686
        %v689 = vadd.f32 %v676, %v687
        %690 = vrot.lane.b32.xlu0 %v666, 125
        %v691 = vpop.permute.xlu0 %690
        %692 = vrot.lane.b32.xlu0 %v669, 125
        %v693 = vpop.permute.xlu0 %692
        %v694 = vsel %vm176, %v691, %v693
        %v696 = vadd.f32 %v689, %v694
        %v697 = vrot.slane %v144, 4
        %v698 = vrot.slane %v146, 4
        %v699 = vsel %vm658, %v697, %v698
        %700 = vrot.lane.b32.xlu0 %v661, 124
        %v701 = vpop.permute.xlu0 %700
        %702 = vrot.lane.b32.xlu0 %v699, 124
        %v703 = vpop.permute.xlu0 %702
        %v704 = vsel %vm186, %v701, %v703
        %v706 = vsub.f32 %v696, %v704
        %v707 = vmax.f32 %v448, -5.0
        %v708 = vmax.f32 %v449, -5.0
        %v709 = vmax.f32 %v450, -5.0
        %v710 = vmax.f32 %v451, -5.0
        %v711 = vmin.f32 %v707, 5.0
        %v712 = vmin.f32 %v708, 5.0
        %v713 = vmin.f32 %v709, 5.0
        %v714 = vmin.f32 %v710, 5.0
        %719 = vrot.lane.b32.xlu0 %v711, 126
        %v720 = vpop.permute.xlu0 %719
        %721 = vrot.lane.b32.xlu0 %v712, 126
        %v722 = vpop.permute.xlu0 %721
        %723 = vrot.lane.b32.xlu0 %v713, 126
        %v724 = vpop.permute.xlu0 %723
        %725 = vrot.lane.b32.xlu0 %v714, 126
        %v726 = vpop.permute.xlu0 %725
        %v727 = vsel %vm168, %v720, %v722
        %v728 = vsel %vm168, %v724, %v726
        %731 = vst [vmem:[%s133 - $0x2] sm:$0xfc] %v727
        %732 = vst [vmem:[%s133 + $0x6] sm:$0x3] %v728
        %s733 = scalar_lea.vmem %s133, 72 [#allocation2]
        %734 = vst [vmem:[%s733 - $0x2] sm:$0xfc] %v727
        %735 = vst [vmem:[%s733 + $0x6] sm:$0x3] %v728
        %v736 = vmax.f32 %v578, -5.0
        %v737 = vmax.f32 %v579, -5.0
        %v738 = vmax.f32 %v580, -5.0
        %v739 = vmax.f32 %v581, -5.0
        %v740 = vmin.f32 %v736, 5.0
        %v741 = vmin.f32 %v737, 5.0
        %v742 = vmin.f32 %v738, 5.0
        %v743 = vmin.f32 %v739, 5.0
        %748 = vrot.lane.b32.xlu0 %v740, 126
        %v749 = vpop.permute.xlu0 %748
        %750 = vrot.lane.b32.xlu0 %v741, 126
        %v751 = vpop.permute.xlu0 %750
        %752 = vrot.lane.b32.xlu0 %v742, 126
        %v753 = vpop.permute.xlu0 %752
        %754 = vrot.lane.b32.xlu0 %v743, 126
        %v755 = vpop.permute.xlu0 %754
        %v756 = vsel %vm168, %v749, %v751
        %v757 = vsel %vm168, %v753, %v755
        %s760 = scalar_lea.vmem %s133, 8 [#allocation2]
        %761 = vst [vmem:[%s760 - $0x2] sm:$0xfc] %v756
        %762 = vst [vmem:[%s760 + $0x6] sm:$0x3] %v757
        %s763 = scalar_lea.vmem %s133, 80 [#allocation2]
        %764 = vst [vmem:[%s763 - $0x2] sm:$0xfc] %v756
        %765 = vst [vmem:[%s763 + $0x6] sm:$0x3] %v757
        %v766 = vmul.f32 %v452, 0.5
        %v767 = vmul.f32 %v453, 0.5
        %v768 = vmul.f32 %v454, 0.5
        %v769 = vmul.f32 %v455, 0.5
        %v770 = vmax.f32 %v766, -5.0
        %v771 = vmax.f32 %v767, -5.0
        %v772 = vmax.f32 %v768, -5.0
        %v773 = vmax.f32 %v769, -5.0
        %v774 = vmin.f32 %v770, 5.0
        %v775 = vmin.f32 %v771, 5.0
        %v776 = vmin.f32 %v772, 5.0
        %v777 = vmin.f32 %v773, 5.0
        %782 = vrot.lane.b32.xlu0 %v774, 127
        %v783 = vpop.permute.xlu0 %782
        %784 = vrot.lane.b32.xlu0 %v775, 127
        %v785 = vpop.permute.xlu0 %784
        %786 = vrot.lane.b32.xlu0 %v776, 127
        %v787 = vpop.permute.xlu0 %786
        %788 = vrot.lane.b32.xlu0 %v777, 127
        %v789 = vpop.permute.xlu0 %788
        %v790 = vsel %vm156, %v783, %v785
        %v791 = vsel %vm156, %v787, %v789
        %s794 = scalar_lea.vmem %s133, 16 [#allocation2]
        %795 = vst [vmem:[%s794 - $0x2] sm:$0xfc] %v790
        %796 = vst [vmem:[%s794 + $0x6] sm:$0x3] %v791
        %s797 = scalar_lea.vmem %s133, 88 [#allocation2]
        %798 = vst [vmem:[%s797 - $0x2] sm:$0xfc] %v790
        %799 = vst [vmem:[%s797 + $0x6] sm:$0x3] %v791
        %v800 = vmul.f32 %v582, 0.5
        %v801 = vmul.f32 %v583, 0.5
        %v802 = vmul.f32 %v584, 0.5
        %v803 = vmul.f32 %v585, 0.5
        %v804 = vmax.f32 %v800, -5.0
        %v805 = vmax.f32 %v801, -5.0
        %v806 = vmax.f32 %v802, -5.0
        %v807 = vmax.f32 %v803, -5.0
        %v808 = vmin.f32 %v804, 5.0
        %v809 = vmin.f32 %v805, 5.0
        %v810 = vmin.f32 %v806, 5.0
        %v811 = vmin.f32 %v807, 5.0
        %816 = vrot.lane.b32.xlu0 %v808, 126
        %v817 = vpop.permute.xlu0 %816
        %818 = vrot.lane.b32.xlu0 %v809, 126
        %v819 = vpop.permute.xlu0 %818
        %820 = vrot.lane.b32.xlu0 %v810, 126
        %v821 = vpop.permute.xlu0 %820
        %822 = vrot.lane.b32.xlu0 %v811, 126
        %v823 = vpop.permute.xlu0 %822
        %v824 = vsel %vm168, %v817, %v819
        %v825 = vsel %vm168, %v821, %v823
        %s828 = scalar_lea.vmem %s133, 24 [#allocation2]
        %829 = vst [vmem:[%s828 - $0x1] sm:$0xfe] %v824
        %830 = vst [vmem:[%s828 + $0x7] sm:$0x1] %v825
        %s831 = scalar_lea.vmem %s133, 96 [#allocation2]
        %832 = vst [vmem:[%s831 - $0x1] sm:$0xfe] %v824
        %833 = vst [vmem:[%s831 + $0x7] sm:$0x1] %v825
        %v834 = vmul.f32 %v521, 0.33333334
        %v835 = vmul.f32 %v522, 0.33333334
        %v836 = vmul.f32 %v523, 0.33333334
        %v837 = vmul.f32 %v524, 0.33333334
        %v838 = vmax.f32 %v834, -5.0
        %v839 = vmax.f32 %v835, -5.0
        %v840 = vmax.f32 %v836, -5.0
        %v841 = vmax.f32 %v837, -5.0
        %v842 = vmin.f32 %v838, 5.0
        %v843 = vmin.f32 %v839, 5.0
        %v844 = vmin.f32 %v840, 5.0
        %v845 = vmin.f32 %v841, 5.0
        %850 = vrot.lane.b32.xlu0 %v842, 127
        %v851 = vpop.permute.xlu0 %850
        %852 = vrot.lane.b32.xlu0 %v843, 127
        %v853 = vpop.permute.xlu0 %852
        %854 = vrot.lane.b32.xlu0 %v844, 127
        %v855 = vpop.permute.xlu0 %854
        %856 = vrot.lane.b32.xlu0 %v845, 127
        %v857 = vpop.permute.xlu0 %856
        %v858 = vsel %vm156, %v851, %v853
        %v859 = vsel %vm156, %v855, %v857
        %s862 = scalar_lea.vmem %s133, 32 [#allocation2]
        %863 = vst [vmem:[%s862 - $0x2] sm:$0xfc] %v858
        %864 = vst [vmem:[%s862 + $0x6] sm:$0x3] %v859
        %s865 = scalar_lea.vmem %s133, 104 [#allocation2]
        %866 = vst [vmem:[%s865 - $0x2] sm:$0xfc] %v858
        %867 = vst [vmem:[%s865 + $0x6] sm:$0x3] %v859
        %v868 = vmul.f32 %v637, 0.25
        %v869 = vmul.f32 %v638, 0.25
        %v870 = vmul.f32 %v639, 0.25
        %v871 = vmul.f32 %v640, 0.25
        %v872 = vmax.f32 %v868, -5.0
        %v873 = vmax.f32 %v869, -5.0
        %v874 = vmax.f32 %v870, -5.0
        %v875 = vmax.f32 %v871, -5.0
        %v876 = vmin.f32 %v872, 5.0
        %v877 = vmin.f32 %v873, 5.0
        %v878 = vmin.f32 %v874, 5.0
        %v879 = vmin.f32 %v875, 5.0
        %884 = vrot.lane.b32.xlu0 %v876, 127
        %v885 = vpop.permute.xlu0 %884
        %886 = vrot.lane.b32.xlu0 %v877, 127
        %v887 = vpop.permute.xlu0 %886
        %888 = vrot.lane.b32.xlu0 %v878, 127
        %v889 = vpop.permute.xlu0 %888
        %890 = vrot.lane.b32.xlu0 %v879, 127
        %v891 = vpop.permute.xlu0 %890
        %v892 = vsel %vm156, %v885, %v887
        %v893 = vsel %vm156, %v889, %v891
        %s896 = scalar_lea.vmem %s133, 40 [#allocation2]
        %897 = vst [vmem:[%s896 - $0x1] sm:$0xfe] %v892
        %898 = vst [vmem:[%s896 + $0x7] sm:$0x1] %v893
        %s899 = scalar_lea.vmem %s133, 112 [#allocation2]
        %900 = vst [vmem:[%s899 - $0x1] sm:$0xfe] %v892
        %901 = vst [vmem:[%s899 + $0x7] sm:$0x1] %v893
        %v902 = vmul.f32 %v706, 0.083333336
        %v903 = vmax.f32 %v902, -5.0
        %v904 = vmin.f32 %v903, 5.0
        %s905 = scalar_lea.vmem %s133, 48 [#allocation2]
        %906 = vst [vmem:[%s905] sm:$0xff] %v904
        %s907 = scalar_lea.vmem %s133, 120 [#allocation2]
        %908 = vst [vmem:[%s907] sm:$0xff] %v904
        %v909 = vmul.f32 %v496, 0.25
        %v910 = vmul.f32 %v497, 0.25
        %v911 = vmul.f32 %v498, 0.25
        %v912 = vmul.f32 %v499, 0.25
        %v913 = vmax.f32 %v909, -5.0
        %v914 = vmax.f32 %v910, -5.0
        %v915 = vmax.f32 %v911, -5.0
        %v916 = vmax.f32 %v912, -5.0
        %v917 = vmin.f32 %v913, 5.0
        %v918 = vmin.f32 %v914, 5.0
        %v919 = vmin.f32 %v915, 5.0
        %v920 = vmin.f32 %v916, 5.0
        %925 = vrot.lane.b32.xlu0 %v917, 127
        %v926 = vpop.permute.xlu0 %925
        %927 = vrot.lane.b32.xlu0 %v918, 127
        %v928 = vpop.permute.xlu0 %927
        %929 = vrot.lane.b32.xlu0 %v919, 127
        %v930 = vpop.permute.xlu0 %929
        %931 = vrot.lane.b32.xlu0 %v920, 127
        %v932 = vpop.permute.xlu0 %931
        %v933 = vsel %vm156, %v926, %v928
        %v934 = vsel %vm156, %v930, %v932
        %s937 = scalar_lea.vmem %s133, 56 [#allocation2]
        %938 = vst [vmem:[%s937 - $0x1] sm:$0xfe] %v933
        %939 = vst [vmem:[%s937 + $0x7] sm:$0x1] %v934
        %v940 = vmul.f32 %v534, 0.083333336
        %v941 = vmax.f32 %v940, -5.0
        %v942 = vmin.f32 %v941, 5.0
        %s943 = scalar_lea.vmem %s133, 64 [#allocation2]
        %944 = vst [vmem:[%s943] sm:$0xff] %v942
        %s945 = sand.u32 %s65, 1
        %s946 = scalar_lea.sflag [#allocation3], %s945
        %s947 = sand.u32 %s65, 1
        %s948 = smul.addr %s947, 128
        %s949 = scalar_lea.vmem [#allocation2], %s948
        // Predicated region
        $region25: #{tpu_custom_call.1} parent=23 // pred_check
          %p950 = pneg %p75
        $region26: #{tpu_custom_call.1} parent=23 // pred_check_branch
          %952 = sbr.rel (%p950) target = $region28
        $region27: #{tpu_custom_call.1} parent=23 // pred_region
          %s954 = ssub.s32 2048, 2048
          %955 = vsyncadd %s946, %s954
          %s956 = sadd.s32 %s20, %s19
          %s957 = smul.addr %s956, 128
          %s958 = scalar_lea.hbm %s1, %s957
          %s959 = sshll.u32 %s949, 4
          %s960 = int_to_ptr.vmem [resolvable:$true] %s959
          %965 = dma.vmem_to_hbm [thread:$0]  %s960, 2048, %s958, %s946, 128, 256, 8
        $region28: #{tpu_custom_call.1} parent=23 // pred_fallthru
          _
      $region24: #{tpu_custom_call.1} parent=5 // pred_fallthru
        _
      %p966 = scmp.le.s32.totalorder 2, %s10
      // Predicated region
      $region29: #{tpu_custom_call.1} parent=5 // pred_check
        %p967 = pneg %p966
      $region30: #{tpu_custom_call.1} parent=5 // pred_check_branch
        %969 = sbr.rel (%p967) target = $region32
      $region31: #{tpu_custom_call.1} parent=5 // pred_region
        %s970 = ssub.s32 %s10, 2
        // Predicated region
        $region33: #{tpu_custom_call.1} parent=31 // pred_check
          %p971 = pneg %p81
        $region34: #{tpu_custom_call.1} parent=31 // pred_check_branch
          %973 = sbr.rel (%p971) target = $region36
        $region35: #{tpu_custom_call.1} parent=31 // pred_region
          %s974 = sand.u32 %s66, 1
          %s975 = scalar_lea.sflag [#allocation3], %s974
          %s976 = sand.u32 %s66, 1
          %s977 = smul.addr %s976, 128
          %s978 = scalar_lea.vmem [#allocation2], %s977
          %979 = dma.done %s975, 2048
        $region36: #{tpu_custom_call.1} parent=31 // pred_fallthru
          _
      $region32: #{tpu_custom_call.1} parent=5 // pred_fallthru
        _
    $region6: #{tpu_custom_call.1} parent=1 // loop_footer
      %s14 = sadd.s32 1, %s10
    $region7: #{tpu_custom_call.1} parent=1 // loop_footer_branch
      %9 = sbr.rel target = $region3
    $region8: #{tpu_custom_call.1} parent=1 // loop_exit
      _
    %980 = vsyncpa [#allocation3], 1
    %s981 = scalar_lea.sflag [#allocation3], 1
    %982 = vsyncpa %s981, 1

</llo_original>
